<compile_context>
chip_gen: v5e
topology: v5e:2x2
jax: 0.10.0
libtpu: 0.0.40
codegen_flags: <defaults>
</compile_context>

<pallas_src>
import jax
import jax.numpy as jnp
from jax.experimental import pallas as pl
from jax.experimental.pallas import tpu as pltpu

HIDDEN = 256
OUT = 1


def mlp_kernel(x_ref, w1_ref, b1_ref, w2_ref, b2_ref, w3_ref, b3_ref, o_ref):
    # layer1: Linear(D, 256) + ReLU.  f32 operands (D is tiny), f32 accumulation.
    h1 = jnp.dot(x_ref[...], w1_ref[...], preferred_element_type=jnp.float32)
    h1 = jnp.maximum(h1 + b1_ref[...], 0.0).astype(jnp.bfloat16)   # bf16 intermediate

    # layer2: Linear(256, 256) + ReLU.  bf16 MXU operands, f32 accumulation.
    h2 = jnp.dot(h1, w2_ref[...], preferred_element_type=jnp.float32)
    h2 = jnp.maximum(h2 + b2_ref[...], 0.0)

    # layer3: Linear(256, 1) + ReLU.  N=1 matmul done on the VPU (broadcast multiply)
    # + lane reduction; b3 read as an SMEM scalar.
    o = jnp.sum(h2 * w3_ref[...], axis=-1)                         # (tb,)
    o = jnp.maximum(o + b3_ref[0, 0], 0.0)

    # lane-dense store: tb results laid along the lane axis of a (1, 1, tb) slab.
    o_ref[...] = o.reshape(1, 1, -1).astype(o_ref.dtype)


def _round_up(v, m):
    return ((v + m - 1) // m) * m


def _pick_tile(batch, tb_target):
    """Lane-aligned batch tile; >=2 tiles when the batch allows it (v7x megacore)."""
    tb = max(128, min(tb_target, _round_up(batch, 128)))
    if batch > 128:
        tb = min(tb, max(128, _round_up(pl.cdiv(batch, 2), 128)))
    return tb


def _vmem_budget_bytes(tb, d):
    x_stream = 2 * tb * d * 4                      # double-buffered x blocks (f32)
    o_stream = 2 * tb * 4                          # double-buffered output slabs
    weights = 2 * (d * HIDDEN * 4 + HIDDEN * HIDDEN * 2 + 3 * HIDDEN * 4 + 4)
    inter = tb * HIDDEN * (4 + 2 + 4)              # f32 layer-1 acc, bf16 h1, f32 h2
    return x_stream + o_stream + weights + inter


def mlp_regression_forward(x, params, tb=2048):
    """x: [B, input_dim] float32. params: dict (see init_params). Returns [B, 1] f32."""
    B, D = x.shape
    tb = _pick_tile(B, tb)
    assert tb % 128 == 0, "batch tile must be a multiple of 128 (lane-dense output)"
    n_tiles = pl.cdiv(B, tb)

    w1 = params["w1"]                              # (D, 256)   f32 (layer-1 MXU)
    b1 = params["b1"]                              # (1, 256)   f32
    w2 = params["w2"].astype(jnp.bfloat16)         # (256, 256) bf16 (layer-2 MXU)
    b2 = params["b2"]                              # (1, 256)   f32
    w3 = params["w3"]                              # (1, 256)   f32 (VPU)
    b3 = params["b3"]                              # (1, 1)     f32 (SMEM scalar)

    flops = 2 * B * (D * HIDDEN + HIDDEN * HIDDEN + HIDDEN)
    bytes_accessed = (B * D * 4 + B * 4
                      + D * HIDDEN * 4 + HIDDEN * HIDDEN * 2 + 3 * HIDDEN * 4 + 4)
    vmem_limit = min(64 * 1024 * 1024,
                     max(32 * 1024 * 1024, 2 * _vmem_budget_bytes(tb, D)))

    out = pl.pallas_call(
        mlp_kernel,
        out_shape=jax.ShapeDtypeStruct((n_tiles, 1, tb), jnp.float32),
        grid_spec=pltpu.PrefetchScalarGridSpec(
            num_scalar_prefetch=0,
            grid=(n_tiles,),
            in_specs=[
                pl.BlockSpec((tb, D), lambda i: (i, 0)),           # x: pipelined per tile
                pl.BlockSpec((D, HIDDEN), lambda i: (0, 0)),       # w1: resident
                pl.BlockSpec((1, HIDDEN), lambda i: (0, 0)),       # b1: resident
                pl.BlockSpec((HIDDEN, HIDDEN), lambda i: (0, 0)),  # w2: resident
                pl.BlockSpec((1, HIDDEN), lambda i: (0, 0)),       # b2: resident
                pl.BlockSpec((1, HIDDEN), lambda i: (0, 0)),       # w3: resident
                pl.BlockSpec(memory_space=pltpu.MemorySpace.SMEM),  # b3: SMEM scalar
            ],
            out_specs=pl.BlockSpec((1, 1, tb), lambda i: (i, 0, 0)),
        ),
        compiler_params=pltpu.CompilerParams(
            dimension_semantics=("parallel",),     # shard batch tiles across TCs on v7x
            vmem_limit_bytes=vmem_limit,
        ),
        cost_estimate=pl.CostEstimate(
            flops=flops, transcendentals=0, bytes_accessed=bytes_accessed),
    )(x, w1, b1, w2, b2, w3, b3)

    # trailing partial block rows (OOB reads) are discarded here
    return out.reshape(n_tiles * tb, 1)[:B]


def init_params(key, input_dim):
    """Deterministic init matching nn.Linear shapes (w1/w2 stored transposed; w3 as a row)."""
    ks = jax.random.split(key, 6)

    def u(k, shape, fan_in):
        bound = 1.0 / jnp.sqrt(fan_in)
        return jax.random.uniform(k, shape, jnp.float32, -bound, bound)

    return {
        "w1": u(ks[0], (input_dim, HIDDEN), input_dim),   # layer1.weight.T
        "b1": u(ks[1], (1, HIDDEN), input_dim),           # layer1.bias
        "w2": u(ks[2], (HIDDEN, HIDDEN), HIDDEN),         # layer2.weight.T
        "b2": u(ks[3], (1, HIDDEN), HIDDEN),              # layer2.bias
        "w3": u(ks[4], (1, HIDDEN), HIDDEN),              # layer3.weight (row)
        "b3": u(ks[5], (1, OUT), HIDDEN),                 # layer3.bias
    }


def reference_forward_kernel_math(x, p):
    """Mirrors the kernel's dtype choices exactly (f32 layer1, bf16 layer2 MXU, f32 epilogue)."""
    h1 = jnp.dot(x, p["w1"], preferred_element_type=jnp.float32)
    h1 = jnp.maximum(h1 + p["b1"], 0.0).astype(jnp.bfloat16)
    h2 = jnp.dot(h1, p["w2"].astype(jnp.bfloat16), preferred_element_type=jnp.float32)
    h2 = jnp.maximum(h2 + p["b2"], 0.0)
    o = jnp.sum(h2 * p["w3"], axis=-1, keepdims=True) + p["b3"]
    return jnp.maximum(o, 0.0)


def reference_forward_f32(x, p):
    """Pure f32 math (the PyTorch module's semantics); bf16 layer-2 diverges at ~1e-3 level."""
    h1 = jnp.maximum(x @ p["w1"] + p["b1"], 0.0)
    h2 = jnp.maximum(h1 @ p["w2"] + p["b2"], 0.0)
    return jnp.maximum(jnp.sum(h2 * p["w3"], axis=-1, keepdims=True) + p["b3"], 0.0)


if __name__ == "__main__":
    key = jax.random.PRNGKey(0)
    kx, kp, kx2 = jax.random.split(key, 3)

    batch, input_dim = 8, 32
    x = jax.random.normal(kx, (batch, input_dim), jnp.float32)
    params = init_params(kp, input_dim)

    out = jax.block_until_ready(mlp_regression_forward(x, params))
    assert out.shape == (batch, 1)
    assert jnp.allclose(out, reference_forward_kernel_math(x, params), atol=1e-3, rtol=1e-3)
    assert jnp.allclose(out, reference_forward_f32(x, params), atol=2e-2, rtol=2e-2)

    # second shape: multi-tile grid with a partial trailing batch block
    batch2 = 300
    x2 = jax.random.normal(kx2, (batch2, input_dim), jnp.float32)
    out2 = jax.block_until_ready(mlp_regression_forward(x2, params))
    assert out2.shape == (batch2, 1)
    assert jnp.allclose(out2, reference_forward_kernel_math(x2, params), atol=1e-3, rtol=1e-3)

    print("KERNEL_OK")
</pallas_src>

<mosaic_0001>
module attributes {stable_mosaic.version = 11 : i64} {
  func.func @mlp_kernel(%arg0: i32, %arg1: memref<128x32xf32, #tpu.memory_space<vmem>>, %arg2: memref<32x256xf32, #tpu.memory_space<vmem>>, %arg3: memref<1x256xf32, #tpu.memory_space<vmem>>, %arg4: memref<256x256xbf16, #tpu.memory_space<vmem>>, %arg5: memref<1x256xf32, #tpu.memory_space<vmem>>, %arg6: memref<1x256xf32, #tpu.memory_space<vmem>>, %arg7: memref<1x1xf32, #tpu.memory_space<smem>>, %arg8: memref<1x1x128xf32, #tpu.memory_space<vmem>>) attributes {dimension_semantics = [#tpu.dimension_semantics<parallel>], iteration_bounds = array<i64: 1>, scalar_prefetch = 0 : i64, scratch_operands = 0 : i64, tpu.core_type = #tpu.core_type<tc>, window_params = [{transform_indices = @transform_0, window_bounds = array<i64: 128, 32>}, {pipeline_mode = #tpu.pipeline_mode<synchronous>, transform_indices = @transform_1, window_bounds = array<i64: 32, 256>}, {pipeline_mode = #tpu.pipeline_mode<synchronous>, transform_indices = @transform_2, window_bounds = array<i64: 1, 256>}, {pipeline_mode = #tpu.pipeline_mode<synchronous>, transform_indices = @transform_3, window_bounds = array<i64: 256, 256>}, {pipeline_mode = #tpu.pipeline_mode<synchronous>, transform_indices = @transform_4, window_bounds = array<i64: 1, 256>}, {pipeline_mode = #tpu.pipeline_mode<synchronous>, transform_indices = @transform_5, window_bounds = array<i64: 1, 256>}, {transform_indices = @transform_6, window_bounds = array<i64: 1, 1>}, {transform_indices = @transform_7, window_bounds = array<i64: 1, 1, 128>}]} {
    %c0 = arith.constant 0 : index
    %c0_0 = arith.constant 0 : index
    %0 = vector.load %arg1[%c0, %c0_0] : memref<128x32xf32, #tpu.memory_space<vmem>>, vector<128x32xf32>
    %c0_1 = arith.constant 0 : index
    %c0_2 = arith.constant 0 : index
    %1 = vector.load %arg2[%c0_1, %c0_2] : memref<32x256xf32, #tpu.memory_space<vmem>>, vector<32x256xf32>
    %cst = arith.constant dense<0.000000e+00> : vector<128x256xf32>
    %2 = tpu.matmul %0, %1, %cst {dimension_numbers = #tpu.dot_dimension_numbers<[1], [0], [0], [1], [0, 0, 1, 1], [], []>} : vector<128x32xf32>, vector<32x256xf32>, vector<128x256xf32> -> vector<128x256xf32>
    %c0_3 = arith.constant 0 : index
    %c0_4 = arith.constant 0 : index
    %3 = vector.load %arg3[%c0_3, %c0_4] : memref<1x256xf32, #tpu.memory_space<vmem>>, vector<1x256xf32>
    %4 = vector.broadcast %3 : vector<1x256xf32> to vector<128x256xf32>
    %5 = arith.addf %2, %4 : vector<128x256xf32>
    %cst_5 = arith.constant 0.000000e+00 : f32
    %6 = vector.broadcast %cst_5 : f32 to vector<128x256xf32>
    %7 = arith.maximumf %5, %6 : vector<128x256xf32>
    %8 = arith.truncf %7 : vector<128x256xf32> to vector<128x256xbf16>
    %c0_6 = arith.constant 0 : index
    %c0_7 = arith.constant 0 : index
    %9 = vector.load %arg4[%c0_6, %c0_7] : memref<256x256xbf16, #tpu.memory_space<vmem>>, vector<256x256xbf16>
    %cst_8 = arith.constant dense<0.000000e+00> : vector<128x256xf32>
    %10 = tpu.matmul %8, %9, %cst_8 {dimension_numbers = #tpu.dot_dimension_numbers<[1], [0], [0], [1], [0, 0, 1, 1], [], []>} : vector<128x256xbf16>, vector<256x256xbf16>, vector<128x256xf32> -> vector<128x256xf32>
    %c0_9 = arith.constant 0 : index
    %c0_10 = arith.constant 0 : index
    %11 = vector.load %arg5[%c0_9, %c0_10] : memref<1x256xf32, #tpu.memory_space<vmem>>, vector<1x256xf32>
    %12 = vector.broadcast %11 : vector<1x256xf32> to vector<128x256xf32>
    %13 = arith.addf %10, %12 : vector<128x256xf32>
    %cst_11 = arith.constant 0.000000e+00 : f32
    %14 = vector.broadcast %cst_11 : f32 to vector<128x256xf32>
    %15 = arith.maximumf %13, %14 : vector<128x256xf32>
    %c0_12 = arith.constant 0 : index
    %c0_13 = arith.constant 0 : index
    %16 = vector.load %arg6[%c0_12, %c0_13] : memref<1x256xf32, #tpu.memory_space<vmem>>, vector<1x256xf32>
    %17 = vector.broadcast %16 : vector<1x256xf32> to vector<128x256xf32>
    %18 = arith.mulf %15, %17 : vector<128x256xf32>
    %cst_14 = arith.constant dense<0.000000e+00> : vector<128xf32>
    %19 = vector.multi_reduction <add>, %18, %cst_14 [1] : vector<128x256xf32> to vector<128xf32>
    %c0_15 = arith.constant 0 : index
    %c0_16 = arith.constant 0 : index
    %20 = memref.load %arg7[%c0_15, %c0_16] : memref<1x1xf32, #tpu.memory_space<smem>>
    %21 = vector.broadcast %20 : f32 to vector<128xf32>
    %22 = arith.addf %19, %21 : vector<128xf32>
    %cst_17 = arith.constant 0.000000e+00 : f32
    %23 = vector.broadcast %cst_17 : f32 to vector<128xf32>
    %24 = arith.maximumf %22, %23 : vector<128xf32>
    %25 = vector.shape_cast %24 : vector<128xf32> to vector<1x1x128xf32>
    %c0_18 = arith.constant 0 : index
    %c0_19 = arith.constant 0 : index
    %c0_20 = arith.constant 0 : index
    %26 = vector.load %arg8[%c0_18, %c0_19, %c0_20] : memref<1x1x128xf32, #tpu.memory_space<vmem>>, vector<1x1x128xf32>
    tpu.vector_store %arg8[%c0_18, %c0_19, %c0_20], %25 {strides = array<i32>} : memref<1x1x128xf32, #tpu.memory_space<vmem>>, vector<1x1x128xf32>,
    return
  }
  func.func @transform_0(%arg0: i32) -> (i32, i32) {
    %c0_i32 = arith.constant 0 : i32
    %c0_i32_0 = arith.constant 0 : i32
    return %arg0, %c0_i32 : i32, i32
  }
  func.func @transform_1(%arg0: i32) -> (i32, i32) {
    %c0_i32 = arith.constant 0 : i32
    %c0_i32_0 = arith.constant 0 : i32
    %c0_i32_1 = arith.constant 0 : i32
    return %c0_i32, %c0_i32_0 : i32, i32
  }
  func.func @transform_2(%arg0: i32) -> (i32, i32) {
    %c0_i32 = arith.constant 0 : i32
    %c0_i32_0 = arith.constant 0 : i32
    %c0_i32_1 = arith.constant 0 : i32
    return %c0_i32, %c0_i32_0 : i32, i32
  }
  func.func @transform_3(%arg0: i32) -> (i32, i32) {
    %c0_i32 = arith.constant 0 : i32
    %c0_i32_0 = arith.constant 0 : i32
    %c0_i32_1 = arith.constant 0 : i32
    return %c0_i32, %c0_i32_0 : i32, i32
  }
  func.func @transform_4(%arg0: i32) -> (i32, i32) {
    %c0_i32 = arith.constant 0 : i32
    %c0_i32_0 = arith.constant 0 : i32
    %c0_i32_1 = arith.constant 0 : i32
    return %c0_i32, %c0_i32_0 : i32, i32
  }
  func.func @transform_5(%arg0: i32) -> (i32, i32) {
    %c0_i32 = arith.constant 0 : i32
    %c0_i32_0 = arith.constant 0 : i32
    %c0_i32_1 = arith.constant 0 : i32
    return %c0_i32, %c0_i32_0 : i32, i32
  }
  func.func @transform_6(%arg0: i32) -> (i32, i32) {
    %c0_i32 = arith.constant 0 : i32
    %c0_i32_0 = arith.constant 0 : i32
    %c0_i32_1 = arith.constant 0 : i32
    return %c0_i32, %c0_i32_0 : i32, i32
  }
  func.func @transform_7(%arg0: i32) -> (i32, i32, i32) {
    %c0_i32 = arith.constant 0 : i32
    %c0_i32_0 = arith.constant 0 : i32
    %c0_i32_1 = arith.constant 0 : i32
    return %arg0, %c0_i32, %c0_i32_0 : i32, i32, i32
  }
}

</mosaic_0001>

<llo_original>
// kernel: tpu_custom_call.1
$region0: #{tpu_custom_call.1}
  #allocation0 [shape = 'u32[]', space=smem, size = 0x4, offset = 0x4, fixed_abs, tag = 'smem constant byte address 0x4 - core index']
  #allocation1 [shape = 'u32[72,128]{1,0:T(1,128)}', space=vmem, size = 0x9000, scoped, tag = 'internal scratch']
  #allocation2 [shape = 'f32[1,1]{1,0:T(1,128)S(6)}', space=smem, size = 0x200, scoped, tag = 'scoped memory for tpu_custom_call.1']
  %s0 = inlined_call_operand.hbm [shape: f32[8,32], index: 0, kind: input, shape index: {}]
  %s1 = inlined_call_operand.hbm [shape: f32[32,256], index: 1, kind: input, shape index: {}]
  %s2 = inlined_call_operand.vmem [shape: f32[1,256], index: 2, kind: input, shape index: {}]
  %s3 = inlined_call_operand.hbm [shape: bf16[256,256], index: 3, kind: input, shape index: {}]
  %s4 = inlined_call_operand.vmem [shape: f32[1,256], index: 4, kind: input, shape index: {}]
  %s5 = inlined_call_operand.vmem [shape: f32[1,256], index: 5, kind: input, shape index: {}]
  %s6 = inlined_call_operand.<no memory space> [shape: f32[1,1], index: 6, kind: input, shape index: {}]
  %s7 = inlined_call_operand.hbm [shape: f32[1,1,128], index: 7, kind: output, shape index: {}]
  %s8 = sld [smem:[#allocation0]]
  $region50: #{tpu_custom_call.1} parent=0
    _
  %s10 = ssub.s32 1, %s8
  %s11 = scalar_select 0, %s10, %s8
  %12 = sst [smem:[#allocation2]] %s6
  $region1: #{tpu_custom_call.1} parent=0
    #allocation3 [shape = 'u8[65536]{0}', space=vmem, size = 0x10000, scoped, tag = 'input window, operand 0, single buffered']
    #allocation4 [shape = 's32[1]{0}', space=sflag, size = 0x4, scoped, tag = 'scoped memory for tpu_custom_call.1']
    #allocation5 [shape = 's32[1]{0}', space=sflag, size = 0x4, scoped, tag = 'scoped memory for tpu_custom_call.1']
    #allocation6 [shape = 'u8[32768]{0}', space=vmem, size = 0x8000, scoped, tag = 'input window, operand 1, single buffered']
    #allocation7 [shape = 's32[1]{0}', space=sflag, size = 0x4, scoped, tag = 'scoped memory for tpu_custom_call.1']
    #allocation8 [shape = 'u8[131072]{0}', space=vmem, size = 0x20000, scoped, tag = 'input window, operand 3, single buffered']
    #allocation9 [shape = 'u8[512]{0}', space=vmem, size = 0x400, scoped, tag = 'output window, operand 0, single buffered']
    %13 = vsyncpa [#allocation4], 0
    %14 = vsyncpa [#allocation7], 0
    %15 = vsyncpa [#allocation5], 0
    // Predicated region
    $region2: #{tpu_custom_call.1} parent=1 // pred_check
      _
    $region3: #{tpu_custom_call.1} parent=1 // pred_check_branch
      %17 = sbr.rel (0) target = $region5
    $region4: #{tpu_custom_call.1} parent=1 // pred_region
      %19 = vsyncadd [#allocation4], 1920
      %s20 = sshll.u32 %s0, 4
      %s21 = int_to_ptr.hbm [resolvable:$true] %s20
      %s22 = sshll.u32 [#allocation3], 4
      %s23 = int_to_ptr.vmem [resolvable:$true] %s22
      %28 = dma.hbm_to_vmem [thread:$0]  %s21, 128, %s23, [#allocation4], 128, 128, 8
    $region5: #{tpu_custom_call.1} parent=1 // pred_fallthru
      _
    // Predicated region
    $region6: #{tpu_custom_call.1} parent=1 // pred_check
      _
    $region7: #{tpu_custom_call.1} parent=1 // pred_check_branch
      %30 = sbr.rel (0) target = $region9
    $region8: #{tpu_custom_call.1} parent=1 // pred_region
      %32 = vsyncadd [#allocation7], 0
      %s33 = sshll.u32 %s1, 4
      %s34 = int_to_ptr.hbm [resolvable:$true] %s33
      %s35 = sshll.u32 [#allocation6], 4
      %s36 = int_to_ptr.vmem [resolvable:$true] %s35
      %41 = dma.hbm_to_vmem [thread:$0]  %s34, 1024, %s36, [#allocation7], 256, 256, 16
    $region9: #{tpu_custom_call.1} parent=1 // pred_fallthru
      _
    // Predicated region
    $region10: #{tpu_custom_call.1} parent=1 // pred_check
      _
    $region11: #{tpu_custom_call.1} parent=1 // pred_check_branch
      %43 = sbr.rel (0) target = $region13
    $region12: #{tpu_custom_call.1} parent=1 // pred_region
      _
    $region13: #{tpu_custom_call.1} parent=1 // pred_fallthru
      _
    // Predicated region
    $region14: #{tpu_custom_call.1} parent=1 // pred_check
      _
    $region15: #{tpu_custom_call.1} parent=1 // pred_check_branch
      %45 = sbr.rel (0) target = $region17
    $region16: #{tpu_custom_call.1} parent=1 // pred_region
      %47 = vsyncadd [#allocation7], 0
      %s48 = sshll.u32 %s3, 4
      %s49 = int_to_ptr.hbm [resolvable:$true] %s48
      %s50 = sshll.u32 [#allocation8], 4
      %s51 = int_to_ptr.vmem [resolvable:$true] %s50
      %56 = dma.hbm_to_vmem [thread:$0]  %s49, 4096, %s51, [#allocation7], 128, 128, 8
    $region17: #{tpu_custom_call.1} parent=1 // pred_fallthru
      _
    // Predicated region
    $region18: #{tpu_custom_call.1} parent=1 // pred_check
      _
    $region19: #{tpu_custom_call.1} parent=1 // pred_check_branch
      %58 = sbr.rel (0) target = $region21
    $region20: #{tpu_custom_call.1} parent=1 // pred_region
      _
    $region21: #{tpu_custom_call.1} parent=1 // pred_fallthru
      _
    // Predicated region
    $region22: #{tpu_custom_call.1} parent=1 // pred_check
      _
    $region23: #{tpu_custom_call.1} parent=1 // pred_check_branch
      %60 = sbr.rel (0) target = $region25
    $region24: #{tpu_custom_call.1} parent=1 // pred_region
      _
    $region25: #{tpu_custom_call.1} parent=1 // pred_fallthru
      _
    // Predicated region
    $region26: #{tpu_custom_call.1} parent=1 // pred_check
      _
    $region27: #{tpu_custom_call.1} parent=1 // pred_check_branch
      %62 = sbr.rel (0) target = $region29
    $region28: #{tpu_custom_call.1} parent=1 // pred_region
      _
    $region29: #{tpu_custom_call.1} parent=1 // pred_fallthru
      _
    // Predicated region
    $region30: #{tpu_custom_call.1} parent=1 // pred_check
      _
    $region31: #{tpu_custom_call.1} parent=1 // pred_check_branch
      %64 = sbr.rel (0) target = $region33
    $region32: #{tpu_custom_call.1} parent=1 // pred_region
      %66 = dma.done [#allocation4], 2048
    $region33: #{tpu_custom_call.1} parent=1 // pred_fallthru
      _
    // Predicated region
    $region34: #{tpu_custom_call.1} parent=1 // pred_check
      _
    $region35: #{tpu_custom_call.1} parent=1 // pred_check_branch
      %68 = sbr.rel (0) target = $region37
    $region36: #{tpu_custom_call.1} parent=1 // pred_region
      %70 = dma.done [#allocation7], 1024
    $region37: #{tpu_custom_call.1} parent=1 // pred_fallthru
      _
    // Predicated region
    $region38: #{tpu_custom_call.1} parent=1 // pred_check
      _
    $region39: #{tpu_custom_call.1} parent=1 // pred_check_branch
      %72 = sbr.rel (0) target = $region41
    $region40: #{tpu_custom_call.1} parent=1 // pred_region
      %74 = dma.done [#allocation7], 4096
    $region41: #{tpu_custom_call.1} parent=1 // pred_fallthru
      _
    %v75 = vld [vmem:[#allocation3] sm:$0xff]
    %v76 = vld [vmem:[#allocation3 + $0x8] sm:$0xff]
    %v77 = vld [vmem:[#allocation3 + $0x10] sm:$0xff]
    %v78 = vld [vmem:[#allocation3 + $0x18] sm:$0xff]
    %v79 = vld [vmem:[#allocation3 + $0x20] sm:$0xff]
    %v80 = vld [vmem:[#allocation3 + $0x28] sm:$0xff]
    %v81 = vld [vmem:[#allocation3 + $0x30] sm:$0xff]
    %v82 = vld [vmem:[#allocation3 + $0x38] sm:$0xff]
    %v83 = vld [vmem:[#allocation3 + $0x40] sm:$0xff]
    %v84 = vld [vmem:[#allocation3 + $0x48] sm:$0xff]
    %v85 = vld [vmem:[#allocation3 + $0x50] sm:$0xff]
    %v86 = vld [vmem:[#allocation3 + $0x58] sm:$0xff]
    %v87 = vld [vmem:[#allocation3 + $0x60] sm:$0xff]
    %v88 = vld [vmem:[#allocation3 + $0x68] sm:$0xff]
    %v89 = vld [vmem:[#allocation3 + $0x70] sm:$0xff]
    %v90 = vld [vmem:[#allocation3 + $0x78] sm:$0xff]
    %v91 = vld [vmem:[#allocation6] sm:$0xff]
    %v92 = vld [vmem:[#allocation6 + $0x8] sm:$0xff]
    %v93 = vld [vmem:[#allocation6 + $0x10] sm:$0xff]
    %v94 = vld [vmem:[#allocation6 + $0x18] sm:$0xff]
    %v95 = vld [vmem:[#allocation6 + $0x20] sm:$0xff]
    %v96 = vld [vmem:[#allocation6 + $0x28] sm:$0xff]
    %v97 = vld [vmem:[#allocation6 + $0x30] sm:$0xff]
    %v98 = vld [vmem:[#allocation6 + $0x38] sm:$0xff]
    %v99 = vld [vmem:[%s2] sm:$0x3]
    %v101 = vperm.slane %v99, 0
    %v102 = vperm.slane %v99, 1
    %vm105 = vcmask 261120
    %v107 = vsel %vm105, %v75, 0
    %v110 = vsel %vm105, %v76, 0
    %v113 = vsel %vm105, %v77, 0
    %v116 = vsel %vm105, %v78, 0
    %v119 = vsel %vm105, %v79, 0
    %v122 = vsel %vm105, %v80, 0
    %v125 = vsel %vm105, %v81, 0
    %v128 = vsel %vm105, %v82, 0
    %v131 = vsel %vm105, %v83, 0
    %v134 = vsel %vm105, %v84, 0
    %v137 = vsel %vm105, %v85, 0
    %v140 = vsel %vm105, %v86, 0
    %v143 = vsel %vm105, %v87, 0
    %v146 = vsel %vm105, %v88, 0
    %v149 = vsel %vm105, %v89, 0
    %v152 = vsel %vm105, %v90, 0
    %154 = vmatpush.msra.mxu0 0.0
    %155 = vmatpush.msra.mxu0 0.0
    %156 = vmatpush.msra.mxu0 0.0
    %157 = vmatpush.msra.mxu0 0.0
    %158 = vmatpush.msra.mxu0 0.0
    %159 = vmatpush.msra.mxu0 0.0
    %160 = vmatpush.msra.mxu0 0.0
    %161 = vmatpush.msra.mxu0 0.0
    %162 = vmatpush.msra.mxu0 0.0
    %163 = vmatpush.msra.mxu0 0.0
    %164 = vmatpush.msra.mxu0 0.0
    %165 = vmatpush.msra.mxu0 0.0
    %166 = vmatpush.msra.mxu0 %v97
    %167 = vmatpush.msra.mxu0 %v95
    %168 = vmatpush.msra.mxu0 %v93
    %169 = vmatpush.msra.mxu0 %v91
    %170 = vmatmul.f32.gmra.mxu0 %v107
    %v171 = vpop.f32.mrf.mxu0
    %v172 = vadd.f32 %v101, %v171
    %173 = vmatmul.f32.gmra.mxu0 %v110
    %v174 = vpop.f32.mrf.mxu0
    %v175 = vadd.f32 %v101, %v174
    %176 = vmatmul.f32.gmra.mxu0 %v113
    %v177 = vpop.f32.mrf.mxu0
    %v178 = vadd.f32 %v101, %v177
    %179 = vmatmul.f32.gmra.mxu0 %v116
    %v180 = vpop.f32.mrf.mxu0
    %v181 = vadd.f32 %v101, %v180
    %182 = vmatmul.f32.gmra.mxu0 %v119
    %v183 = vpop.f32.mrf.mxu0
    %v184 = vadd.f32 %v101, %v183
    %185 = vmatmul.f32.gmra.mxu0 %v122
    %v186 = vpop.f32.mrf.mxu0
    %v187 = vadd.f32 %v101, %v186
    %188 = vmatmul.f32.gmra.mxu0 %v125
    %v189 = vpop.f32.mrf.mxu0
    %v190 = vadd.f32 %v101, %v189
    %191 = vmatmul.f32.gmra.mxu0 %v128
    %v192 = vpop.f32.mrf.mxu0
    %v193 = vadd.f32 %v101, %v192
    %194 = vmatmul.f32.gmra.mxu0 %v131
    %v195 = vpop.f32.mrf.mxu0
    %v196 = vadd.f32 %v101, %v195
    %197 = vmatmul.f32.gmra.mxu0 %v134
    %v198 = vpop.f32.mrf.mxu0
    %v199 = vadd.f32 %v101, %v198
    %200 = vmatmul.f32.gmra.mxu0 %v137
    %v201 = vpop.f32.mrf.mxu0
    %v202 = vadd.f32 %v101, %v201
    %203 = vmatmul.f32.gmra.mxu0 %v140
    %v204 = vpop.f32.mrf.mxu0
    %v205 = vadd.f32 %v101, %v204
    %206 = vmatmul.f32.gmra.mxu0 %v143
    %v207 = vpop.f32.mrf.mxu0
    %v208 = vadd.f32 %v101, %v207
    %209 = vmatmul.f32.gmra.mxu0 %v146
    %v210 = vpop.f32.mrf.mxu0
    %v211 = vadd.f32 %v101, %v210
    %212 = vmatmul.f32.gmra.mxu0 %v149
    %v213 = vpop.f32.mrf.mxu0
    %v214 = vadd.f32 %v101, %v213
    %215 = vmatmul.f32.gmra.mxu0 %v152
    %v216 = vpop.f32.mrf.mxu0
    %v217 = vadd.f32 %v101, %v216
    %218 = vdwg.mxu0
    %219 = vmatpush.msra.mxu0 0.0
    %220 = vmatpush.msra.mxu0 0.0
    %221 = vmatpush.msra.mxu0 0.0
    %222 = vmatpush.msra.mxu0 0.0
    %223 = vmatpush.msra.mxu0 0.0
    %224 = vmatpush.msra.mxu0 0.0
    %225 = vmatpush.msra.mxu0 0.0
    %226 = vmatpush.msra.mxu0 0.0
    %227 = vmatpush.msra.mxu0 0.0
    %228 = vmatpush.msra.mxu0 0.0
    %229 = vmatpush.msra.mxu0 0.0
    %230 = vmatpush.msra.mxu0 0.0
    %231 = vmatpush.msra.mxu0 %v98
    %232 = vmatpush.msra.mxu0 %v96
    %233 = vmatpush.msra.mxu0 %v94
    %234 = vmatpush.msra.mxu0 %v92
    %235 = vmatmul.f32.gmra.mxu0 %v107
    %v236 = vpop.f32.mrf.mxu0
    %v237 = vadd.f32 %v102, %v236
    %238 = vmatmul.f32.gmra.mxu0 %v110
    %v239 = vpop.f32.mrf.mxu0
    %v240 = vadd.f32 %v102, %v239
    %241 = vmatmul.f32.gmra.mxu0 %v113
    %v242 = vpop.f32.mrf.mxu0
    %v243 = vadd.f32 %v102, %v242
    %244 = vmatmul.f32.gmra.mxu0 %v116
    %v245 = vpop.f32.mrf.mxu0
    %v246 = vadd.f32 %v102, %v245
    %247 = vmatmul.f32.gmra.mxu0 %v119
    %v248 = vpop.f32.mrf.mxu0
    %v249 = vadd.f32 %v102, %v248
    %250 = vmatmul.f32.gmra.mxu0 %v122
    %v251 = vpop.f32.mrf.mxu0
    %v252 = vadd.f32 %v102, %v251
    %253 = vmatmul.f32.gmra.mxu0 %v125
    %v254 = vpop.f32.mrf.mxu0
    %v255 = vadd.f32 %v102, %v254
    %256 = vmatmul.f32.gmra.mxu0 %v128
    %v257 = vpop.f32.mrf.mxu0
    %v258 = vadd.f32 %v102, %v257
    %259 = vmatmul.f32.gmra.mxu0 %v131
    %v260 = vpop.f32.mrf.mxu0
    %v261 = vadd.f32 %v102, %v260
    %262 = vmatmul.f32.gmra.mxu0 %v134
    %v263 = vpop.f32.mrf.mxu0
    %v264 = vadd.f32 %v102, %v263
    %265 = vmatmul.f32.gmra.mxu0 %v137
    %v266 = vpop.f32.mrf.mxu0
    %v267 = vadd.f32 %v102, %v266
    %268 = vmatmul.f32.gmra.mxu0 %v140
    %v269 = vpop.f32.mrf.mxu0
    %v270 = vadd.f32 %v102, %v269
    %271 = vmatmul.f32.gmra.mxu0 %v143
    %v272 = vpop.f32.mrf.mxu0
    %v273 = vadd.f32 %v102, %v272
    %274 = vmatmul.f32.gmra.mxu0 %v146
    %v275 = vpop.f32.mrf.mxu0
    %v276 = vadd.f32 %v102, %v275
    %277 = vmatmul.f32.gmra.mxu0 %v149
    %v278 = vpop.f32.mrf.mxu0
    %v279 = vadd.f32 %v102, %v278
    %280 = vmatmul.f32.gmra.mxu0 %v152
    %v281 = vpop.f32.mrf.mxu0
    %v282 = vadd.f32 %v102, %v281
    %283 = vdwg.mxu0
    %v284 = vmax.f32 %v172, 0.0
    %v285 = vmax.f32 %v237, 0.0
    %v286 = vmax.f32 %v175, 0.0
    %v287 = vmax.f32 %v240, 0.0
    %v288 = vmax.f32 %v178, 0.0
    %v289 = vmax.f32 %v243, 0.0
    %v290 = vmax.f32 %v181, 0.0
    %v291 = vmax.f32 %v246, 0.0
    %v292 = vmax.f32 %v184, 0.0
    %v293 = vmax.f32 %v249, 0.0
    %v294 = vmax.f32 %v187, 0.0
    %v295 = vmax.f32 %v252, 0.0
    %v296 = vmax.f32 %v190, 0.0
    %v297 = vmax.f32 %v255, 0.0
    %v298 = vmax.f32 %v193, 0.0
    %v299 = vmax.f32 %v258, 0.0
    %v300 = vmax.f32 %v196, 0.0
    %v301 = vmax.f32 %v261, 0.0
    %v302 = vmax.f32 %v199, 0.0
    %v303 = vmax.f32 %v264, 0.0
    %v304 = vmax.f32 %v202, 0.0
    %v305 = vmax.f32 %v267, 0.0
    %v306 = vmax.f32 %v205, 0.0
    %v307 = vmax.f32 %v270, 0.0
    %v308 = vmax.f32 %v208, 0.0
    %v309 = vmax.f32 %v273, 0.0
    %v310 = vmax.f32 %v211, 0.0
    %v311 = vmax.f32 %v276, 0.0
    %v312 = vmax.f32 %v214, 0.0
    %v313 = vmax.f32 %v279, 0.0
    %v314 = vmax.f32 %v217, 0.0
    %v315 = vmax.f32 %v282, 0.0
    %v316 = vpack.c.bf16 %v286, %v284
    %v317 = vpack.c.bf16 %v287, %v285
    %v318 = vpack.c.bf16 %v290, %v288
    %v319 = vpack.c.bf16 %v291, %v289
    %v320 = vpack.c.bf16 %v294, %v292
    %v321 = vpack.c.bf16 %v295, %v293
    %v322 = vpack.c.bf16 %v298, %v296
    %v323 = vpack.c.bf16 %v299, %v297
    %v324 = vpack.c.bf16 %v302, %v300
    %v325 = vpack.c.bf16 %v303, %v301
    %v326 = vpack.c.bf16 %v306, %v304
    %v327 = vpack.c.bf16 %v307, %v305
    %v328 = vpack.c.bf16 %v310, %v308
    %v329 = vpack.c.bf16 %v311, %v309
    %v330 = vpack.c.bf16 %v314, %v312
    %v331 = vpack.c.bf16 %v315, %v313
    %v332 = vld [vmem:[#allocation8] sm:$0xff]
    %v333 = vld [vmem:[#allocation8 + $0x8] sm:$0xff]
    %v334 = vld [vmem:[#allocation8 + $0x10] sm:$0xff]
    %v335 = vld [vmem:[#allocation8 + $0x18] sm:$0xff]
    %v336 = vld [vmem:[#allocation8 + $0x20] sm:$0xff]
    %v337 = vld [vmem:[#allocation8 + $0x28] sm:$0xff]
    %v338 = vld [vmem:[#allocation8 + $0x30] sm:$0xff]
    %v339 = vld [vmem:[#allocation8 + $0x38] sm:$0xff]
    %v340 = vld [vmem:[#allocation8 + $0x40] sm:$0xff]
    %v341 = vld [vmem:[#allocation8 + $0x48] sm:$0xff]
    %v342 = vld [vmem:[#allocation8 + $0x50] sm:$0xff]
    %v343 = vld [vmem:[#allocation8 + $0x58] sm:$0xff]
    %v344 = vld [vmem:[#allocation8 + $0x60] sm:$0xff]
    %v345 = vld [vmem:[#allocation8 + $0x68] sm:$0xff]
    %v346 = vld [vmem:[#allocation8 + $0x70] sm:$0xff]
    %v347 = vld [vmem:[#allocation8 + $0x78] sm:$0xff]
    %v348 = vld [vmem:[#allocation8 + $0x80] sm:$0xff]
    %v349 = vld [vmem:[#allocation8 + $0x88] sm:$0xff]
    %v350 = vld [vmem:[#allocation8 + $0x90] sm:$0xff]
    %v351 = vld [vmem:[#allocation8 + $0x98] sm:$0xff]
    %v352 = vld [vmem:[#allocation8 + $0xa0] sm:$0xff]
    %v353 = vld [vmem:[#allocation8 + $0xa8] sm:$0xff]
    %v354 = vld [vmem:[#allocation8 + $0xb0] sm:$0xff]
    %v355 = vld [vmem:[#allocation8 + $0xb8] sm:$0xff]
    %v356 = vld [vmem:[#allocation8 + $0xc0] sm:$0xff]
    %v357 = vld [vmem:[#allocation8 + $0xc8] sm:$0xff]
    %v358 = vld [vmem:[#allocation8 + $0xd0] sm:$0xff]
    %v359 = vld [vmem:[#allocation8 + $0xd8] sm:$0xff]
    %v360 = vld [vmem:[#allocation8 + $0xe0] sm:$0xff]
    %v361 = vld [vmem:[#allocation8 + $0xe8] sm:$0xff]
    %v362 = vld [vmem:[#allocation8 + $0xf0] sm:$0xff]
    %v363 = vld [vmem:[#allocation8 + $0xf8] sm:$0xff]
    %v364 = vld [vmem:[%s4] sm:$0x3]
    %v366 = vperm.slane %v364, 0
    %v367 = vperm.slane %v364, 1
    %v402 = vunpack.c.l.b16 %v332
    %v403 = vunpack.c.h.b16 %v332
    %v404 = vunpack.c.l.b16 %v333
    %v405 = vunpack.c.h.b16 %v333
    %v406 = vunpack.c.l.b16 %v334
    %v407 = vunpack.c.h.b16 %v334
    %v408 = vunpack.c.l.b16 %v335
    %v409 = vunpack.c.h.b16 %v335
    %v410 = vunpack.c.l.b16 %v336
    %v411 = vunpack.c.h.b16 %v336
    %v412 = vunpack.c.l.b16 %v337
    %v413 = vunpack.c.h.b16 %v337
    %v414 = vunpack.c.l.b16 %v338
    %v415 = vunpack.c.h.b16 %v338
    %v416 = vunpack.c.l.b16 %v339
    %v417 = vunpack.c.h.b16 %v339
    %v418 = vunpack.c.l.b16 %v340
    %v419 = vunpack.c.h.b16 %v340
    %v420 = vunpack.c.l.b16 %v341
    %v421 = vunpack.c.h.b16 %v341
    %v422 = vunpack.c.l.b16 %v342
    %v423 = vunpack.c.h.b16 %v342
    %v424 = vunpack.c.l.b16 %v343
    %v425 = vunpack.c.h.b16 %v343
    %v426 = vunpack.c.l.b16 %v344
    %v427 = vunpack.c.h.b16 %v344
    %v428 = vunpack.c.l.b16 %v345
    %v429 = vunpack.c.h.b16 %v345
    %v430 = vunpack.c.l.b16 %v346
    %v431 = vunpack.c.h.b16 %v346
    %v432 = vunpack.c.l.b16 %v347
    %v433 = vunpack.c.h.b16 %v347
    %v434 = vunpack.c.l.b16 %v348
    %v435 = vunpack.c.h.b16 %v348
    %v436 = vunpack.c.l.b16 %v349
    %v437 = vunpack.c.h.b16 %v349
    %v438 = vunpack.c.l.b16 %v350
    %v439 = vunpack.c.h.b16 %v350
    %v440 = vunpack.c.l.b16 %v351
    %v441 = vunpack.c.h.b16 %v351
    %v442 = vunpack.c.l.b16 %v352
    %v443 = vunpack.c.h.b16 %v352
    %v444 = vunpack.c.l.b16 %v353
    %v445 = vunpack.c.h.b16 %v353
    %v446 = vunpack.c.l.b16 %v354
    %v447 = vunpack.c.h.b16 %v354
    %v448 = vunpack.c.l.b16 %v355
    %v449 = vunpack.c.h.b16 %v355
    %v450 = vunpack.c.l.b16 %v356
    %v451 = vunpack.c.h.b16 %v356
    %v452 = vunpack.c.l.b16 %v357
    %v453 = vunpack.c.h.b16 %v357
    %v454 = vunpack.c.l.b16 %v358
    %v455 = vunpack.c.h.b16 %v358
    %v456 = vunpack.c.l.b16 %v359
    %v457 = vunpack.c.h.b16 %v359
    %v458 = vunpack.c.l.b16 %v360
    %v459 = vunpack.c.h.b16 %v360
    %v460 = vunpack.c.l.b16 %v361
    %v461 = vunpack.c.h.b16 %v361
    %v462 = vunpack.c.l.b16 %v362
    %v463 = vunpack.c.h.b16 %v362
    %v464 = vunpack.c.l.b16 %v363
    %v465 = vunpack.c.h.b16 %v363
    %v466 = vpack.c.b16 %v404, %v402
    %v467 = vpack.c.b16 %v405, %v403
    %v468 = vpack.c.b16 %v408, %v406
    %v469 = vpack.c.b16 %v409, %v407
    %v470 = vpack.c.b16 %v412, %v410
    %v471 = vpack.c.b16 %v413, %v411
    %v472 = vpack.c.b16 %v416, %v414
    %v473 = vpack.c.b16 %v417, %v415
    %v474 = vpack.c.b16 %v420, %v418
    %v475 = vpack.c.b16 %v421, %v419
    %v476 = vpack.c.b16 %v424, %v422
    %v477 = vpack.c.b16 %v425, %v423
    %v478 = vpack.c.b16 %v428, %v426
    %v479 = vpack.c.b16 %v429, %v427
    %v480 = vpack.c.b16 %v432, %v430
    %v481 = vpack.c.b16 %v433, %v431
    %v482 = vpack.c.b16 %v436, %v434
    %v483 = vpack.c.b16 %v437, %v435
    %v484 = vpack.c.b16 %v440, %v438
    %v485 = vpack.c.b16 %v441, %v439
    %v486 = vpack.c.b16 %v444, %v442
    %v487 = vpack.c.b16 %v445, %v443
    %v488 = vpack.c.b16 %v448, %v446
    %v489 = vpack.c.b16 %v449, %v447
    %v490 = vpack.c.b16 %v452, %v450
    %v491 = vpack.c.b16 %v453, %v451
    %v492 = vpack.c.b16 %v456, %v454
    %v493 = vpack.c.b16 %v457, %v455
    %v494 = vpack.c.b16 %v460, %v458
    %v495 = vpack.c.b16 %v461, %v459
    %v496 = vpack.c.b16 %v464, %v462
    %v497 = vpack.c.b16 %v465, %v463
    %530 = vmatpush.bf16.msra.mxu0 %v480
    %531 = vmatpush.bf16.msra.mxu0 %v478
    %532 = vmatpush.bf16.msra.mxu0 %v476
    %533 = vmatpush.bf16.msra.mxu0 %v474
    %534 = vmatpush.bf16.msra.mxu0 %v472
    %535 = vmatpush.bf16.msra.mxu0 %v470
    %536 = vmatpush.bf16.msra.mxu0 %v468
    %537 = vmatpush.bf16.msra.mxu0 %v466
    %538 = vmatmul.bf16.gmra.mxu0 %v316
    %v539 = vpop.f32.mrf.mxu0
    %v540 = vadd.f32 %v366, %v539
    %v541 = vpop.f32.mrf.mxu0
    %v542 = vadd.f32 %v366, %v541
    %543 = vmatmul.bf16.gmra.mxu0 %v318
    %v544 = vpop.f32.mrf.mxu0
    %v545 = vadd.f32 %v366, %v544
    %v546 = vpop.f32.mrf.mxu0
    %v547 = vadd.f32 %v366, %v546
    %548 = vmatmul.bf16.gmra.mxu0 %v320
    %v549 = vpop.f32.mrf.mxu0
    %v550 = vadd.f32 %v366, %v549
    %v551 = vpop.f32.mrf.mxu0
    %v552 = vadd.f32 %v366, %v551
    %553 = vmatmul.bf16.gmra.mxu0 %v322
    %v554 = vpop.f32.mrf.mxu0
    %v555 = vadd.f32 %v366, %v554
    %v556 = vpop.f32.mrf.mxu0
    %v557 = vadd.f32 %v366, %v556
    %558 = vmatmul.bf16.gmra.mxu0 %v324
    %v559 = vpop.f32.mrf.mxu0
    %v560 = vadd.f32 %v366, %v559
    %v561 = vpop.f32.mrf.mxu0
    %v562 = vadd.f32 %v366, %v561
    %563 = vmatmul.bf16.gmra.mxu0 %v326
    %v564 = vpop.f32.mrf.mxu0
    %v565 = vadd.f32 %v366, %v564
    %v566 = vpop.f32.mrf.mxu0
    %v567 = vadd.f32 %v366, %v566
    %568 = vmatmul.bf16.gmra.mxu0 %v328
    %v569 = vpop.f32.mrf.mxu0
    %v570 = vadd.f32 %v366, %v569
    %v571 = vpop.f32.mrf.mxu0
    %v572 = vadd.f32 %v366, %v571
    %573 = vmatmul.bf16.gmra.mxu0 %v330
    %v574 = vpop.f32.mrf.mxu0
    %v575 = vadd.f32 %v366, %v574
    %v576 = vpop.f32.mrf.mxu0
    %v577 = vadd.f32 %v366, %v576
    %578 = vdwg.mxu0
    %579 = vmatpush.bf16.msra.mxu0 %v496
    %580 = vmatpush.bf16.msra.mxu0 %v494
    %581 = vmatpush.bf16.msra.mxu0 %v492
    %582 = vmatpush.bf16.msra.mxu0 %v490
    %583 = vmatpush.bf16.msra.mxu0 %v488
    %584 = vmatpush.bf16.msra.mxu0 %v486
    %585 = vmatpush.bf16.msra.mxu0 %v484
    %586 = vmatpush.bf16.msra.mxu0 %v482
    %587 = vmatmul.bf16.gmra.mxu0 %v317
    %v588 = vpop.f32.mrf.mxu0
    %v589 = vadd.f32 %v540, %v588
    %v590 = vpop.f32.mrf.mxu0
    %v591 = vadd.f32 %v542, %v590
    %592 = vmatmul.bf16.gmra.mxu0 %v319
    %v593 = vpop.f32.mrf.mxu0
    %v594 = vadd.f32 %v545, %v593
    %v595 = vpop.f32.mrf.mxu0
    %v596 = vadd.f32 %v547, %v595
    %597 = vmatmul.bf16.gmra.mxu0 %v321
    %v598 = vpop.f32.mrf.mxu0
    %v599 = vadd.f32 %v550, %v598
    %v600 = vpop.f32.mrf.mxu0
    %v601 = vadd.f32 %v552, %v600
    %602 = vmatmul.bf16.gmra.mxu0 %v323
    %v603 = vpop.f32.mrf.mxu0
    %v604 = vadd.f32 %v555, %v603
    %v605 = vpop.f32.mrf.mxu0
    %v606 = vadd.f32 %v557, %v605
    %607 = vmatmul.bf16.gmra.mxu0 %v325
    %v608 = vpop.f32.mrf.mxu0
    %v609 = vadd.f32 %v560, %v608
    %v610 = vpop.f32.mrf.mxu0
    %v611 = vadd.f32 %v562, %v610
    %612 = vmatmul.bf16.gmra.mxu0 %v327
    %v613 = vpop.f32.mrf.mxu0
    %v614 = vadd.f32 %v565, %v613
    %v615 = vpop.f32.mrf.mxu0
    %v616 = vadd.f32 %v567, %v615
    %617 = vmatmul.bf16.gmra.mxu0 %v329
    %v618 = vpop.f32.mrf.mxu0
    %v619 = vadd.f32 %v570, %v618
    %v620 = vpop.f32.mrf.mxu0
    %v621 = vadd.f32 %v572, %v620
    %622 = vmatmul.bf16.gmra.mxu0 %v331
    %v623 = vpop.f32.mrf.mxu0
    %v624 = vadd.f32 %v575, %v623
    %v625 = vpop.f32.mrf.mxu0
    %v626 = vadd.f32 %v577, %v625
    %627 = vdwg.mxu0
    %628 = vmatpush.bf16.msra.mxu0 %v481
    %629 = vmatpush.bf16.msra.mxu0 %v479
    %630 = vmatpush.bf16.msra.mxu0 %v477
    %631 = vmatpush.bf16.msra.mxu0 %v475
    %632 = vmatpush.bf16.msra.mxu0 %v473
    %633 = vmatpush.bf16.msra.mxu0 %v471
    %634 = vmatpush.bf16.msra.mxu0 %v469
    %635 = vmatpush.bf16.msra.mxu0 %v467
    %636 = vmatmul.bf16.gmra.mxu0 %v316
    %v637 = vpop.f32.mrf.mxu0
    %v638 = vadd.f32 %v367, %v637
    %v639 = vpop.f32.mrf.mxu0
    %v640 = vadd.f32 %v367, %v639
    %641 = vmatmul.bf16.gmra.mxu0 %v318
    %v642 = vpop.f32.mrf.mxu0
    %v643 = vadd.f32 %v367, %v642
    %v644 = vpop.f32.mrf.mxu0
    %v645 = vadd.f32 %v367, %v644
    %646 = vmatmul.bf16.gmra.mxu0 %v320
    %v647 = vpop.f32.mrf.mxu0
    %v648 = vadd.f32 %v367, %v647
    %v649 = vpop.f32.mrf.mxu0
    %v650 = vadd.f32 %v367, %v649
    %651 = vmatmul.bf16.gmra.mxu0 %v322
    %v652 = vpop.f32.mrf.mxu0
    %v653 = vadd.f32 %v367, %v652
    %v654 = vpop.f32.mrf.mxu0
    %v655 = vadd.f32 %v367, %v654
    %656 = vmatmul.bf16.gmra.mxu0 %v324
    %v657 = vpop.f32.mrf.mxu0
    %v658 = vadd.f32 %v367, %v657
    %v659 = vpop.f32.mrf.mxu0
    %v660 = vadd.f32 %v367, %v659
    %661 = vmatmul.bf16.gmra.mxu0 %v326
    %v662 = vpop.f32.mrf.mxu0
    %v663 = vadd.f32 %v367, %v662
    %v664 = vpop.f32.mrf.mxu0
    %v665 = vadd.f32 %v367, %v664
    %666 = vmatmul.bf16.gmra.mxu0 %v328
    %v667 = vpop.f32.mrf.mxu0
    %v668 = vadd.f32 %v367, %v667
    %v669 = vpop.f32.mrf.mxu0
    %v670 = vadd.f32 %v367, %v669
    %671 = vmatmul.bf16.gmra.mxu0 %v330
    %v672 = vpop.f32.mrf.mxu0
    %v673 = vadd.f32 %v367, %v672
    %v674 = vpop.f32.mrf.mxu0
    %v675 = vadd.f32 %v367, %v674
    %676 = vdwg.mxu0
    %677 = vmatpush.bf16.msra.mxu0 %v497
    %678 = vmatpush.bf16.msra.mxu0 %v495
    %679 = vmatpush.bf16.msra.mxu0 %v493
    %680 = vmatpush.bf16.msra.mxu0 %v491
    %681 = vmatpush.bf16.msra.mxu0 %v489
    %682 = vmatpush.bf16.msra.mxu0 %v487
    %683 = vmatpush.bf16.msra.mxu0 %v485
    %684 = vmatpush.bf16.msra.mxu0 %v483
    %685 = vmatmul.bf16.gmra.mxu0 %v317
    %v686 = vpop.f32.mrf.mxu0
    %v687 = vadd.f32 %v638, %v686
    %v688 = vpop.f32.mrf.mxu0
    %v689 = vadd.f32 %v640, %v688
    %690 = vmatmul.bf16.gmra.mxu0 %v319
    %v691 = vpop.f32.mrf.mxu0
    %v692 = vadd.f32 %v643, %v691
    %v693 = vpop.f32.mrf.mxu0
    %v694 = vadd.f32 %v645, %v693
    %695 = vmatmul.bf16.gmra.mxu0 %v321
    %v696 = vpop.f32.mrf.mxu0
    %v697 = vadd.f32 %v648, %v696
    %v698 = vpop.f32.mrf.mxu0
    %v699 = vadd.f32 %v650, %v698
    %700 = vmatmul.bf16.gmra.mxu0 %v323
    %v701 = vpop.f32.mrf.mxu0
    %v702 = vadd.f32 %v653, %v701
    %v703 = vpop.f32.mrf.mxu0
    %v704 = vadd.f32 %v655, %v703
    %705 = vmatmul.bf16.gmra.mxu0 %v325
    %v706 = vpop.f32.mrf.mxu0
    %v707 = vadd.f32 %v658, %v706
    %v708 = vpop.f32.mrf.mxu0
    %v709 = vadd.f32 %v660, %v708
    %710 = vmatmul.bf16.gmra.mxu0 %v327
    %v711 = vpop.f32.mrf.mxu0
    %v712 = vadd.f32 %v663, %v711
    %v713 = vpop.f32.mrf.mxu0
    %v714 = vadd.f32 %v665, %v713
    %715 = vmatmul.bf16.gmra.mxu0 %v329
    %v716 = vpop.f32.mrf.mxu0
    %v717 = vadd.f32 %v668, %v716
    %v718 = vpop.f32.mrf.mxu0
    %v719 = vadd.f32 %v670, %v718
    %720 = vmatmul.bf16.gmra.mxu0 %v331
    %v721 = vpop.f32.mrf.mxu0
    %v722 = vadd.f32 %v673, %v721
    %v723 = vpop.f32.mrf.mxu0
    %v724 = vadd.f32 %v675, %v723
    %725 = vdwg.mxu0
    %v726 = vmax.f32 %v589, 0.0
    %v727 = vmax.f32 %v687, 0.0
    %v728 = vmax.f32 %v591, 0.0
    %v729 = vmax.f32 %v689, 0.0
    %v730 = vmax.f32 %v594, 0.0
    %v731 = vmax.f32 %v692, 0.0
    %v732 = vmax.f32 %v596, 0.0
    %v733 = vmax.f32 %v694, 0.0
    %v734 = vmax.f32 %v599, 0.0
    %v735 = vmax.f32 %v697, 0.0
    %v736 = vmax.f32 %v601, 0.0
    %v737 = vmax.f32 %v699, 0.0
    %v738 = vmax.f32 %v604, 0.0
    %v739 = vmax.f32 %v702, 0.0
    %v740 = vmax.f32 %v606, 0.0
    %v741 = vmax.f32 %v704, 0.0
    %v742 = vmax.f32 %v609, 0.0
    %v743 = vmax.f32 %v707, 0.0
    %v744 = vmax.f32 %v611, 0.0
    %v745 = vmax.f32 %v709, 0.0
    %v746 = vmax.f32 %v614, 0.0
    %v747 = vmax.f32 %v712, 0.0
    %v748 = vmax.f32 %v616, 0.0
    %v749 = vmax.f32 %v714, 0.0
    %v750 = vmax.f32 %v619, 0.0
    %v751 = vmax.f32 %v717, 0.0
    %v752 = vmax.f32 %v621, 0.0
    %v753 = vmax.f32 %v719, 0.0
    %v754 = vmax.f32 %v624, 0.0
    %v755 = vmax.f32 %v722, 0.0
    %v756 = vmax.f32 %v626, 0.0
    %v757 = vmax.f32 %v724, 0.0
    %v758 = vld [vmem:[%s5] sm:$0x3]
    %v760 = vperm.slane %v758, 0
    %v761 = vperm.slane %v758, 1
    %v764 = vmul.f32 %v726, %v760
    %v765 = vmul.f32 %v727, %v761
    %v766 = vmul.f32 %v728, %v760
    %v767 = vmul.f32 %v729, %v761
    %v768 = vmul.f32 %v730, %v760
    %v769 = vmul.f32 %v731, %v761
    %v770 = vmul.f32 %v732, %v760
    %v771 = vmul.f32 %v733, %v761
    %v772 = vmul.f32 %v734, %v760
    %v773 = vmul.f32 %v735, %v761
    %v774 = vmul.f32 %v736, %v760
    %v775 = vmul.f32 %v737, %v761
    %v776 = vmul.f32 %v738, %v760
    %v777 = vmul.f32 %v739, %v761
    %v778 = vmul.f32 %v740, %v760
    %v779 = vmul.f32 %v741, %v761
    %v780 = vmul.f32 %v742, %v760
    %v781 = vmul.f32 %v743, %v761
    %v782 = vmul.f32 %v744, %v760
    %v783 = vmul.f32 %v745, %v761
    %v784 = vmul.f32 %v746, %v760
    %v785 = vmul.f32 %v747, %v761
    %v786 = vmul.f32 %v748, %v760
    %v787 = vmul.f32 %v749, %v761
    %v788 = vmul.f32 %v750, %v760
    %v789 = vmul.f32 %v751, %v761
    %v790 = vmul.f32 %v752, %v760
    %v791 = vmul.f32 %v753, %v761
    %v792 = vmul.f32 %v754, %v760
    %v793 = vmul.f32 %v755, %v761
    %v794 = vmul.f32 %v756, %v760
    %v795 = vmul.f32 %v757, %v761
    %v796 = vadd.f32 %v764, %v765
    %797 = vadd.xlane.f32.xlu0 %v796
    %v798 = vpop.xlane.xlu0 %797
    %v799 = vadd.f32 %v766, %v767
    %800 = vadd.xlane.f32.xlu0 %v799
    %v801 = vpop.xlane.xlu0 %800
    %v802 = vadd.f32 %v768, %v769
    %803 = vadd.xlane.f32.xlu0 %v802
    %v804 = vpop.xlane.xlu0 %803
    %v805 = vadd.f32 %v770, %v771
    %806 = vadd.xlane.f32.xlu0 %v805
    %v807 = vpop.xlane.xlu0 %806
    %v808 = vadd.f32 %v772, %v773
    %809 = vadd.xlane.f32.xlu0 %v808
    %v810 = vpop.xlane.xlu0 %809
    %v811 = vadd.f32 %v774, %v775
    %812 = vadd.xlane.f32.xlu0 %v811
    %v813 = vpop.xlane.xlu0 %812
    %v814 = vadd.f32 %v776, %v777
    %815 = vadd.xlane.f32.xlu0 %v814
    %v816 = vpop.xlane.xlu0 %815
    %v817 = vadd.f32 %v778, %v779
    %818 = vadd.xlane.f32.xlu0 %v817
    %v819 = vpop.xlane.xlu0 %818
    %v820 = vadd.f32 %v780, %v781
    %821 = vadd.xlane.f32.xlu0 %v820
    %v822 = vpop.xlane.xlu0 %821
    %v823 = vadd.f32 %v782, %v783
    %824 = vadd.xlane.f32.xlu0 %v823
    %v825 = vpop.xlane.xlu0 %824
    %v826 = vadd.f32 %v784, %v785
    %827 = vadd.xlane.f32.xlu0 %v826
    %v828 = vpop.xlane.xlu0 %827
    %v829 = vadd.f32 %v786, %v787
    %830 = vadd.xlane.f32.xlu0 %v829
    %v831 = vpop.xlane.xlu0 %830
    %v832 = vadd.f32 %v788, %v789
    %833 = vadd.xlane.f32.xlu0 %v832
    %v834 = vpop.xlane.xlu0 %833
    %v835 = vadd.f32 %v790, %v791
    %836 = vadd.xlane.f32.xlu0 %v835
    %v837 = vpop.xlane.xlu0 %836
    %v838 = vadd.f32 %v792, %v793
    %839 = vadd.xlane.f32.xlu0 %v838
    %v840 = vpop.xlane.xlu0 %839
    %v841 = vadd.f32 %v794, %v795
    %842 = vadd.xlane.f32.xlu0 %v841
    %v843 = vpop.xlane.xlu0 %842
    %s844 = sld [smem:[#allocation2]]
    %v845 = vstv %s844
    %v846 = vadd.f32 %v798, %v845
    %v847 = vadd.f32 %v801, %v845
    %v848 = vadd.f32 %v804, %v845
    %v849 = vadd.f32 %v807, %v845
    %v850 = vadd.f32 %v810, %v845
    %v851 = vadd.f32 %v813, %v845
    %v852 = vadd.f32 %v816, %v845
    %v853 = vadd.f32 %v819, %v845
    %v854 = vadd.f32 %v822, %v845
    %v855 = vadd.f32 %v825, %v845
    %v856 = vadd.f32 %v828, %v845
    %v857 = vadd.f32 %v831, %v845
    %v858 = vadd.f32 %v834, %v845
    %v859 = vadd.f32 %v837, %v845
    %v860 = vadd.f32 %v840, %v845
    %v861 = vadd.f32 %v843, %v845
    %v862 = vmax.f32 %v846, 0.0
    %v863 = vmax.f32 %v847, 0.0
    %v864 = vmax.f32 %v848, 0.0
    %v865 = vmax.f32 %v849, 0.0
    %v866 = vmax.f32 %v850, 0.0
    %v867 = vmax.f32 %v851, 0.0
    %v868 = vmax.f32 %v852, 0.0
    %v869 = vmax.f32 %v853, 0.0
    %v870 = vmax.f32 %v854, 0.0
    %v871 = vmax.f32 %v855, 0.0
    %v872 = vmax.f32 %v856, 0.0
    %v873 = vmax.f32 %v857, 0.0
    %v874 = vmax.f32 %v858, 0.0
    %v875 = vmax.f32 %v859, 0.0
    %v876 = vmax.f32 %v860, 0.0
    %v877 = vmax.f32 %v861, 0.0
    %v894 = vlaneseq
    %v895 = vand.u32 %v894, 127
    %v896 = vperm.slane %v862, %v895
    %v897 = vadd.s32 %v895, 4294967288
    %v898 = vperm.slane %v863, %v897
    %vm899 = vcmask 130112
    %v900 = vsel %vm899, %v898, %v896
    %v901 = vadd.s32 %v895, 4294967280
    %v902 = vperm.slane %v864, %v901
    %vm903 = vcmask 195712
    %v904 = vsel %vm903, %v902, %v900
    %v905 = vadd.s32 %v895, 4294967272
    %v906 = vperm.slane %v865, %v905
    %vm907 = vcmask 261312
    %v908 = vsel %vm907, %v906, %v904
    %v909 = vadd.s32 %v895, 4294967264
    %v910 = vperm.slane %v866, %v909
    %vm911 = vcmask 326912
    %v912 = vsel %vm911, %v910, %v908
    %v913 = vadd.s32 %v895, 4294967256
    %v914 = vperm.slane %v867, %v913
    %vm915 = vcmask 392512
    %v916 = vsel %vm915, %v914, %v912
    %v917 = vadd.s32 %v895, 4294967248
    %v918 = vperm.slane %v868, %v917
    %vm919 = vcmask 458112
    %v920 = vsel %vm919, %v918, %v916
    %v921 = vadd.s32 %v895, 4294967240
    %v922 = vperm.slane %v869, %v921
    %vm923 = vcmask 523712
    %v924 = vsel %vm923, %v922, %v920
    %v925 = vadd.s32 %v895, 4294967232
    %v926 = vperm.slane %v870, %v925
    %vm927 = vcmask 589312
    %v928 = vsel %vm927, %v926, %v924
    %v929 = vadd.s32 %v895, 4294967224
    %v930 = vperm.slane %v871, %v929
    %vm931 = vcmask 654912
    %v932 = vsel %vm931, %v930, %v928
    %v933 = vadd.s32 %v895, 4294967216
    %v934 = vperm.slane %v872, %v933
    %vm935 = vcmask 720512
    %v936 = vsel %vm935, %v934, %v932
    %v937 = vadd.s32 %v895, 4294967208
    %v938 = vperm.slane %v873, %v937
    %vm939 = vcmask 786112
    %v940 = vsel %vm939, %v938, %v936
    %v941 = vadd.s32 %v895, 4294967200
    %v942 = vperm.slane %v874, %v941
    %vm943 = vcmask 851712
    %v944 = vsel %vm943, %v942, %v940
    %v945 = vadd.s32 %v895, 4294967192
    %v946 = vperm.slane %v875, %v945
    %vm947 = vcmask 917312
    %v948 = vsel %vm947, %v946, %v944
    %v949 = vadd.s32 %v895, 4294967184
    %v950 = vperm.slane %v876, %v949
    %vm951 = vcmask 982912
    %v952 = vsel %vm951, %v950, %v948
    %v953 = vadd.s32 %v895, 4294967176
    %v954 = vperm.slane %v877, %v953
    %vm955 = vcmask 1048512
    %v956 = vsel %vm955, %v954, %v952
    %958 = vst [vmem:[#allocation9] sm:$0x1] %v956
    // Predicated region
    $region42: #{tpu_custom_call.1} parent=1 // pred_check
      _
    $region43: #{tpu_custom_call.1} parent=1 // pred_check_branch
      %960 = sbr.rel (0) target = $region45
    $region44: #{tpu_custom_call.1} parent=1 // pred_region
      %962 = vsyncadd [#allocation5], 0
      %s964 = sshll.u32 [#allocation9], 4
      %s965 = int_to_ptr.vmem [resolvable:$true] %s964
      %s966 = sshll.u32 %s7, 4
      %s967 = int_to_ptr.hbm [resolvable:$true] %s966
      %969 = dma.vmem_to_hbm [thread:$0]  %s965, 16, %s967, [#allocation5]
    $region45: #{tpu_custom_call.1} parent=1 // pred_fallthru
      _
    // Predicated region
    $region46: #{tpu_custom_call.1} parent=1 // pred_check
      _
    $region47: #{tpu_custom_call.1} parent=1 // pred_check_branch
      %971 = sbr.rel (0) target = $region49
    $region48: #{tpu_custom_call.1} parent=1 // pred_region
      %973 = dma.done [#allocation5], 16
    $region49: #{tpu_custom_call.1} parent=1 // pred_fallthru
      _
    %974 = vsyncpa [#allocation4], 1
    %975 = vsyncpa [#allocation7], 1
    %976 = vsyncpa [#allocation5], 1

</llo_original>
